<compile_context>
chip_gen: v5e
topology: v5e:2x2
jax: 0.10.0
libtpu: 0.0.40
codegen_flags: <defaults>
</compile_context>

<pallas_src>
import functools

import jax
import jax.numpy as jnp
from jax.experimental import pallas as pl
from jax.experimental.pallas import tpu as pltpu

# Voxels (lanes) per grid step.  Kept a multiple of 128; safe against the default
# scoped-VMEM limit on every generation (16 MiB v5e, 32 MiB v6e/v7x).
_MAX_TILE = 32768


def _round_up(x, m):
    return ((x + m - 1) // m) * m


def _ce_kernel(x_ref, t_ref, ce_ref, sum_ref, acc_ref, *, hw, tile):
    """Per-voxel cross-entropy, channel-on-sublane layout.

    x_ref  : (C, tile)  logits (any float dtype; upcast in-register), voxels on lanes
    t_ref  : (1, tile)  i32 target class
    ce_ref : (1, tile)  f32 per-voxel CE output (lane dense)
    sum_ref: (1, 128)   f32 per-batch partial CE sum (written on last tile)
    acc_ref: (1, tile)  f32 running lane-wise accumulator (VMEM scratch)
    """
    j = pl.program_id(1)
    nj = pl.num_programs(1)

    x = x_ref[...].astype(jnp.float32)   # upcast in-register, not in the wrapper
    t = t_ref[...]                       # (1, tile)

    # numerically-stable log-softmax along the channel (sublane) axis
    m = jnp.max(x, axis=0, keepdims=True)                          # (1, tile)
    lse = m + jnp.log(jnp.sum(jnp.exp(x - m), axis=0, keepdims=True))

    # gather the target-class logit via iota/compare/select over sublanes
    ch = jax.lax.broadcasted_iota(jnp.int32, x.shape, 0)           # (C, tile)
    picked = jnp.sum(jnp.where(ch == t, x, 0.0), axis=0, keepdims=True)

    ce = lse - picked                                              # (1, tile)

    # Per-voxel CE map: out-of-range lanes of the final partial block are simply
    # dropped by the BlockSpec writeback, so no mask is needed for the store.
    ce_ref[...] = ce

    @pl.when(j == 0)
    def _():
        acc_ref[...] = jnp.zeros_like(acc_ref)

    if hw % tile == 0:
        # every tile is full: no tail mask anywhere on the hot path
        acc_ref[...] += ce
    else:
        @pl.when(j != nj - 1)
        def _():
            acc_ref[...] += ce

        @pl.when(j == nj - 1)
        def _():
            # only the single final partial tile pays for the iota/compare/select
            lane = jax.lax.broadcasted_iota(jnp.int32, (1, tile), 1)
            valid = (j * tile + lane) < hw
            # keep the select (NOT multiply-by-mask): garbage tail lanes may have
            # flowed through exp/log and hold inf/NaN.
            acc_ref[...] += jnp.where(valid, ce, 0.0)

    @pl.when(j == nj - 1)
    def _():
        # single cross-lane reduce per batch element, broadcast into 128 lanes
        sum_ref[...] = jnp.broadcast_to(jnp.sum(acc_ref[...]), sum_ref.shape)


def _per_voxel_ce(x, t, tile):
    """x: (B, C, HW) float, t: (B, 1, HW) i32 ->
       (ce_map (B, 1, HW) f32, partial_sums (B, 1, 128) f32)."""
    b, c, hw = x.shape
    grid_j = pl.cdiv(hw, tile)
    kernel = functools.partial(_ce_kernel, hw=hw, tile=tile)
    # TODO(synk): for v7x with B == 1 (large-slice inference) add a second
    # "parallel" grid axis splitting the voxel range so both TensorCores are used;
    # needs careful handling of the duplicated/clamped final block, so it is left
    # out here to keep the writeback exact.
    return pl.pallas_call(
        kernel,
        out_shape=(
            jax.ShapeDtypeStruct((b, 1, hw), jnp.float32),
            jax.ShapeDtypeStruct((b, 1, 128), jnp.float32),
        ),
        grid_spec=pltpu.PrefetchScalarGridSpec(
            num_scalar_prefetch=0,
            grid=(b, grid_j),
            in_specs=[
                pl.BlockSpec((pl.Squeezed(), c, tile), lambda i, j: (i, 0, j)),
                pl.BlockSpec((pl.Squeezed(), 1, tile), lambda i, j: (i, 0, j)),
            ],
            out_specs=[
                pl.BlockSpec((pl.Squeezed(), 1, tile), lambda i, j: (i, 0, j)),
                pl.BlockSpec((pl.Squeezed(), 1, 128), lambda i, j: (i, 0, 0)),
            ],
            scratch_shapes=[pltpu.VMEM((1, tile), jnp.float32)],
        ),
        compiler_params=pltpu.CompilerParams(
            # batch axis parallel (splits across the 2 TCs on v7x when B >= 2),
            # voxel-tile axis carries the resident accumulator -> arbitrary.
            dimension_semantics=("parallel", "arbitrary"),
        ),
    )(x, t)


@functools.partial(jax.jit, static_argnames=("k_count",))
def _jitted_forward(net_output, target, awl_params, k_count):
    b, c, h, w = net_output.shape
    hw = h * w
    n = b * hw

    # pure reshapes only: no transpose, no pad, no wrapper-side dtype copy of the
    # logits (upcast happens in-register inside the kernel).
    x = net_output.reshape(b, c, hw)
    t = target.reshape(b, 1, hw).astype(jnp.int32)

    tile = min(_MAX_TILE, _round_up(hw, 128))

    ce_map, partial_sums = _per_voxel_ce(x, t, tile)

    ce_sum = jnp.sum(partial_sums[:, 0, 0])
    ce_loss = ce_sum / jnp.float32(n)

    # TODO(synk): at realistic nnUNet volumes (n ~ 1e6-1e7 voxels) replace this
    # global jax.lax.top_k (a full sort over 10% of all voxels plus an HBM
    # re-read of ce_map) with an in-kernel histogram + threshold two-pass
    # selection; exact top_k is kept here to match the torch module bit-for-bit.
    per_voxel = ce_map.reshape(-1)                 # exactly n real voxels, no padding
    topk_vals, _ = jax.lax.top_k(per_voxel, k_count)
    topk_loss = jnp.mean(topk_vals)

    p = awl_params
    result = (0.5 / (p[0] ** 2)) * ce_loss + jnp.log1p(p[0] ** 2) \
           + (0.5 / (p[1] ** 2)) * topk_loss + jnp.log1p(p[1] ** 2)
    return result


def auto_weighted_ce_and_topk_loss(net_output, target, awl_params=None, k=10.0):
    """Forward pass of AutoWeighted_CE_and_topk_loss (ignore_label=None).

    Note: k_count is clamped to >= 1 for tiny inputs (torch would produce NaN
    when n*k/100 < 1).
    """
    if awl_params is None:
        # AutomaticWeightedLoss(2): params deterministically init to ones.
        awl_params = jnp.ones((2,), dtype=jnp.float32)
    b, c, h, w = net_output.shape
    n = b * h * w
    # static (Python int) -> jax.lax.top_k needs a concrete k.
    k_count = max(1, int(n * k / 100))
    return _jitted_forward(net_output, target, awl_params, k_count)


def _reference(net_output, target, awl_params, k_count):
    """Pure-JAX reference for a sanity check."""
    logits = net_output.astype(jnp.float32)
    logp = jax.nn.log_softmax(logits, axis=1)
    t = target[:, 0].astype(jnp.int32)                       # (B, H, W)
    picked = jnp.take_along_axis(logp, t[:, None], axis=1)[:, 0]
    ce = -picked
    ce_loss = ce.mean()
    topk_vals, _ = jax.lax.top_k(ce.reshape(-1), k_count)
    topk_loss = topk_vals.mean()
    p = awl_params
    return (0.5 / (p[0] ** 2)) * ce_loss + jnp.log1p(p[0] ** 2) \
         + (0.5 / (p[1] ** 2)) * topk_loss + jnp.log1p(p[1] ** 2)


if __name__ == "__main__":
    key = jax.random.PRNGKey(0)
    k1, k2 = jax.random.split(key)

    B, C, H, W = 2, 4, 16, 16
    net_output = jax.random.normal(k1, (B, C, H, W), dtype=jnp.float32)
    target = jax.random.randint(k2, (B, 1, H, W), 0, C, dtype=jnp.int32)

    out = auto_weighted_ce_and_topk_loss(net_output, target)
    jax.block_until_ready(out)

    ref = _reference(net_output, target, jnp.ones((2,), jnp.float32),
                     max(1, int(B * H * W * 10 / 100)))
    jax.block_until_ready(ref)
    assert abs(float(out) - float(ref)) <= 1e-5 + 1e-3 * abs(float(ref)), \
        f"mismatch: kernel={float(out)} ref={float(ref)}"

    print("KERNEL_OK")
</pallas_src>

<mosaic_0001>
module attributes {stable_mosaic.version = 11 : i64} {
  func.func @_ce_kernel(%arg0: i32, %arg1: i32, %arg2: memref<1x4x256xf32, #tpu.memory_space<vmem>>, %arg3: memref<1x1x256xi32, #tpu.memory_space<vmem>>, %arg4: memref<1x1x256xf32, #tpu.memory_space<vmem>>, %arg5: memref<1x1x128xf32, #tpu.memory_space<vmem>>, %arg6: memref<1x256xf32, #tpu.memory_space<vmem>>) attributes {dimension_semantics = [#tpu.dimension_semantics<parallel>, #tpu.dimension_semantics<arbitrary>], iteration_bounds = array<i64: 2, 1>, scalar_prefetch = 0 : i64, scratch_operands = 1 : i64, tpu.core_type = #tpu.core_type<tc>, window_params = [{transform_indices = @transform_0, window_bounds = array<i64: 1, 4, 256>}, {transform_indices = @transform_1, window_bounds = array<i64: 1, 1, 256>}, {transform_indices = @transform_2, window_bounds = array<i64: 1, 1, 256>}, {transform_indices = @transform_3, window_bounds = array<i64: 1, 1, 128>}]} {
    %c0 = arith.constant 0 : index
    %c0_0 = arith.constant 0 : index
    %c0_1 = arith.constant 0 : index
    %0 = vector.load %arg2[%c0, %c0_0, %c0_1] : memref<1x4x256xf32, #tpu.memory_space<vmem>>, vector<1x4x256xf32>
    %1 = vector.shape_cast %0 : vector<1x4x256xf32> to vector<4x256xf32>
    %c0_2 = arith.constant 0 : index
    %c0_3 = arith.constant 0 : index
    %c0_4 = arith.constant 0 : index
    %2 = vector.load %arg3[%c0_2, %c0_3, %c0_4] : memref<1x1x256xi32, #tpu.memory_space<vmem>>, vector<1x1x256xi32>
    %3 = vector.shape_cast %2 : vector<1x1x256xi32> to vector<1x256xi32>
    %cst = arith.constant dense<0xFF800000> : vector<256xf32>
    %4 = vector.multi_reduction <maximumf>, %1, %cst [0] : vector<4x256xf32> to vector<256xf32>
    %5 = vector.shape_cast %4 : vector<256xf32> to vector<1x256xf32>
    %6 = vector.broadcast %5 : vector<1x256xf32> to vector<4x256xf32>
    %7 = arith.subf %1, %6 : vector<4x256xf32>
    %8 = math.exp %7 : vector<4x256xf32>
    %cst_5 = arith.constant dense<0.000000e+00> : vector<256xf32>
    %9 = vector.multi_reduction <add>, %8, %cst_5 [0] : vector<4x256xf32> to vector<256xf32>
    %10 = vector.shape_cast %9 : vector<256xf32> to vector<1x256xf32>
    %11 = math.log %10 : vector<1x256xf32>
    %12 = arith.addf %5, %11 : vector<1x256xf32>
    %13 = tpu.iota {dimensions = array<i32: 0>} : vector<4x256xi32>
    %14 = vector.broadcast %3 : vector<1x256xi32> to vector<4x256xi32>
    %15 = arith.cmpi eq, %13, %14 : vector<4x256xi32>
    %cst_6 = arith.constant 0.000000e+00 : f32
    %16 = vector.broadcast %cst_6 : f32 to vector<4x256xf32>
    %17 = arith.select %15, %1, %16 : vector<4x256xi1>, vector<4x256xf32>
    %cst_7 = arith.constant dense<0.000000e+00> : vector<256xf32>
    %18 = vector.multi_reduction <add>, %17, %cst_7 [0] : vector<4x256xf32> to vector<256xf32>
    %19 = vector.shape_cast %18 : vector<256xf32> to vector<1x256xf32>
    %20 = arith.subf %12, %19 : vector<1x256xf32>
    %c0_8 = arith.constant 0 : index
    %c0_9 = arith.constant 0 : index
    %c0_10 = arith.constant 0 : index
    %21 = vector.load %arg4[%c0_8, %c0_9, %c0_10] : memref<1x1x256xf32, #tpu.memory_space<vmem>>, vector<1x1x256xf32>
    %22 = vector.shape_cast %21 : vector<1x1x256xf32> to vector<1x256xf32>
    %23 = vector.shape_cast %20 : vector<1x256xf32> to vector<1x1x256xf32>
    tpu.vector_store %arg4[%c0_8, %c0_9, %c0_10], %23 {strides = array<i32>} : memref<1x1x256xf32, #tpu.memory_space<vmem>>, vector<1x1x256xf32>,
    %c0_i32 = arith.constant 0 : i32
    %24 = arith.cmpi eq, %arg1, %c0_i32 : i32
    %25 = arith.extui %24 : i1 to i32
    %c0_i32_11 = arith.constant 0 : i32
    %26 = arith.cmpi ne, %25, %c0_i32_11 : i32
    scf.if %26 {
      %cst_18 = arith.constant 0.000000e+00 : f32
      %33 = vector.broadcast %cst_18 : f32 to vector<1x256xf32>
      %c0_19 = arith.constant 0 : index
      %c0_20 = arith.constant 0 : index
      %34 = vector.load %arg6[%c0_19, %c0_20] : memref<1x256xf32, #tpu.memory_space<vmem>>, vector<1x256xf32>
      tpu.vector_store %arg6[%c0_19, %c0_20], %33 {strides = array<i32>} : memref<1x256xf32, #tpu.memory_space<vmem>>, vector<1x256xf32>,
    } else {
    }
    %c0_12 = arith.constant 0 : index
    %c0_13 = arith.constant 0 : index
    %27 = vector.load %arg6[%c0_12, %c0_13] : memref<1x256xf32, #tpu.memory_space<vmem>>, vector<1x256xf32>
    %28 = arith.addf %27, %20 : vector<1x256xf32>
    %c0_14 = arith.constant 0 : index
    %c0_15 = arith.constant 0 : index
    %29 = vector.load %arg6[%c0_14, %c0_15] : memref<1x256xf32, #tpu.memory_space<vmem>>, vector<1x256xf32>
    tpu.vector_store %arg6[%c0_14, %c0_15], %28 {strides = array<i32>} : memref<1x256xf32, #tpu.memory_space<vmem>>, vector<1x256xf32>,
    %c0_i32_16 = arith.constant 0 : i32
    %30 = arith.cmpi eq, %arg1, %c0_i32_16 : i32
    %31 = arith.extui %30 : i1 to i32
    %c0_i32_17 = arith.constant 0 : i32
    %32 = arith.cmpi ne, %31, %c0_i32_17 : i32
    scf.if %32 {
      %c0_18 = arith.constant 0 : index
      %c0_19 = arith.constant 0 : index
      %33 = vector.load %arg6[%c0_18, %c0_19] : memref<1x256xf32, #tpu.memory_space<vmem>>, vector<1x256xf32>
      %34 = vector.shape_cast %33 : vector<1x256xf32> to vector<1x1x256xf32>
      %cst_20 = arith.constant dense<0.000000e+00> : vector<1xf32>
      %35 = vector.multi_reduction <add>, %34, %cst_20 [1, 2] : vector<1x1x256xf32> to vector<1xf32>
      %36 = vector.shape_cast %35 : vector<1xf32> to vector<1x1x1xf32>
      %37 = vector.extract %36[0, 0, 0] : f32 from vector<1x1x1xf32>
      %38 = vector.broadcast %37 : f32 to vector<1x128xf32>
      %c0_21 = arith.constant 0 : index
      %c0_22 = arith.constant 0 : index
      %c0_23 = arith.constant 0 : index
      %39 = vector.load %arg5[%c0_21, %c0_22, %c0_23] : memref<1x1x128xf32, #tpu.memory_space<vmem>>, vector<1x1x128xf32>
      %40 = vector.shape_cast %39 : vector<1x1x128xf32> to vector<1x128xf32>
      %41 = vector.shape_cast %38 : vector<1x128xf32> to vector<1x1x128xf32>
      tpu.vector_store %arg5[%c0_21, %c0_22, %c0_23], %41 {strides = array<i32>} : memref<1x1x128xf32, #tpu.memory_space<vmem>>, vector<1x1x128xf32>,
    } else {
    }
    return
  }
  func.func @transform_0(%arg0: i32, %arg1: i32) -> (i32, i32, i32) {
    %c0_i32 = arith.constant 0 : i32
    %c0_i32_0 = arith.constant 0 : i32
    return %arg0, %c0_i32, %arg1 : i32, i32, i32
  }
  func.func @transform_1(%arg0: i32, %arg1: i32) -> (i32, i32, i32) {
    %c0_i32 = arith.constant 0 : i32
    %c0_i32_0 = arith.constant 0 : i32
    return %arg0, %c0_i32, %arg1 : i32, i32, i32
  }
  func.func @transform_2(%arg0: i32, %arg1: i32) -> (i32, i32, i32) {
    %c0_i32 = arith.constant 0 : i32
    %c0_i32_0 = arith.constant 0 : i32
    return %arg0, %c0_i32, %arg1 : i32, i32, i32
  }
  func.func @transform_3(%arg0: i32, %arg1: i32) -> (i32, i32, i32) {
    %c0_i32 = arith.constant 0 : i32
    %c0_i32_0 = arith.constant 0 : i32
    %c0_i32_1 = arith.constant 0 : i32
    return %arg0, %c0_i32, %c0_i32_0 : i32, i32, i32
  }
}

</mosaic_0001>

<llo_original>
// kernel: _jitted_forward.1
$region0: #{_jitted_forward.1}
  #allocation0 [shape = 'u32[]', space=smem, size = 0x4, offset = 0x4, fixed_abs, tag = 'smem constant byte address 0x4 - core index']
  #allocation1 [shape = 'u32[72,128]{1,0:T(1,128)}', space=vmem, size = 0x9000, scoped, tag = 'internal scratch']
  #allocation2 [shape = 'f32[1,256]{1,0:T(1,128)}', space=vmem, size = 0x400, scoped, tag = 'scratch operand']
  %s0 = inlined_call_operand.vmem [shape: f32[2,4,256], index: 0, kind: input, shape index: {}]
  %s1 = inlined_call_operand.vmem [shape: s32[2,1,256], index: 1, kind: input, shape index: {}]
  %s2 = inlined_call_operand.vmem [shape: f32[2,1,256], index: 2, kind: output, shape index: {0}]
  %s3 = inlined_call_operand.vmem [shape: f32[2,1,128], index: 3, kind: output, shape index: {1}]
  %4 = xla_tuple %s2, %s3
  %s5 = sld [smem:[#allocation0]]
  $region57: #{_jitted_forward.1} parent=0
    _
  %s7 = ssub.s32 1, %s5
  %s8 = scalar_select 0, %s7, %s5
  loop: start=0, step=1, limit=4
  $region2: #{_jitted_forward.1} parent=0 // loop_pre_header
    _
  $region3: #{_jitted_forward.1} parent=0 // loop_header
    %s10 = sphi 0, %s14
    %p11 = scmp.ge.s32.totalorder %s10, 4
    %s17 = sphi 0, %s29
    %s18 = sphi 0, %s25
    %s19 = sphi 0, %s17
    %s20 = sphi 0, %s18
    %s21 = sphi 0, %s19
    %s22 = sphi 0, %s20
    %s34 = sphi 0, %s36
    %s37 = sphi 0, %s34
    %s38 = sphi 0, %s37
    %s54 = sphi 0, %s38
    %s62 = sphi 0, %s64
    %s65 = sphi 0, %s62
    %s66 = sphi 0, %s65
    %s82 = sphi 0, %s66
    %s90 = sphi 0, %s92
    %s93 = sphi 0, %s90
    %s94 = sphi 0, %s93
    %s110 = sphi 0, %s94
    %s116 = sphi 0, %s118
    %s119 = sphi 0, %s116
    %s120 = sphi 0, %s119
    %s136 = sphi 0, %s120
  $region4: #{_jitted_forward.1} parent=0 // loop_header_branch
    %13 = sbr.rel (%p11) target = $region8
  $region5: #{_jitted_forward.1} parent=0 // loop_body
    %s15 = ssub.s32 %s10, 1
    %s16 = ssub.s32 %s10, 2
    %s23 = sadd.s32 1, %s18
    %p24 = scmp.ge.s32.totalorder %s23, 1
    %s25 = scalar_select %p24, 0, %s23
    %s26 = sadd.s32 1, %s17
    %s27 = scalar_select %p24, %s26, %s17
    %p28 = scmp.ge.s32.totalorder %s27, 2
    %s29 = scalar_select %p28, 0, %s27
    %s30 = ssub.s32 %s17, %s29
    %s31 = ssub.s32 %s18, %s25
    %s32 = sor.u32 %s30, %s31
    %p33 = scmp.eq.s32.totalorder %s32, 0
    %s35 = sadd.s32 %s34, 1
    %s36 = scalar_select %p33, %s34, %s35
    %p39 = pneg %p33
    %p40 = scmp.eq.s32.totalorder %s10, 1
    %p41 = por %p39, %p40
    %p42 = scmp.ne.s32.totalorder %s34, %s37
    %p43 = scmp.eq.s32.totalorder %s10, 0
    %p44 = por %p42, %p43
    %p45 = scmp.ne.s32.totalorder %s34, %s37
    %p46 = scmp.eq.s32.totalorder %s15, 1
    %p47 = por %p45, %p46
    %p48 = scmp.ne.s32.totalorder %s37, %s38
    %p49 = scmp.eq.s32.totalorder %s15, 0
    %p50 = por %p48, %p49
    %p51 = scmp.ne.s32.totalorder %s37, %s38
    %p52 = scmp.eq.s32.totalorder %s16, 1
    %p53 = por %p51, %p52
    %p55 = scmp.ne.s32.totalorder %s38, %s54
    %p56 = scmp.eq.s32.totalorder %s16, 0
    %p57 = por %p55, %p56
    %s58 = ssub.s32 %s17, %s29
    %s59 = ssub.s32 %s18, %s25
    %s60 = sor.u32 %s58, %s59
    %p61 = scmp.eq.s32.totalorder %s60, 0
    %s63 = sadd.s32 %s62, 1
    %s64 = scalar_select %p61, %s62, %s63
    %p67 = pneg %p61
    %p68 = scmp.eq.s32.totalorder %s10, 1
    %p69 = por %p67, %p68
    %p70 = scmp.ne.s32.totalorder %s62, %s65
    %p71 = scmp.eq.s32.totalorder %s10, 0
    %p72 = por %p70, %p71
    %p73 = scmp.ne.s32.totalorder %s62, %s65
    %p74 = scmp.eq.s32.totalorder %s15, 1
    %p75 = por %p73, %p74
    %p76 = scmp.ne.s32.totalorder %s65, %s66
    %p77 = scmp.eq.s32.totalorder %s15, 0
    %p78 = por %p76, %p77
    %p79 = scmp.ne.s32.totalorder %s65, %s66
    %p80 = scmp.eq.s32.totalorder %s16, 1
    %p81 = por %p79, %p80
    %p83 = scmp.ne.s32.totalorder %s66, %s82
    %p84 = scmp.eq.s32.totalorder %s16, 0
    %p85 = por %p83, %p84
    %s86 = ssub.s32 %s17, %s29
    %s87 = ssub.s32 %s18, %s25
    %s88 = sor.u32 %s86, %s87
    %p89 = scmp.eq.s32.totalorder %s88, 0
    %s91 = sadd.s32 %s90, 1
    %s92 = scalar_select %p89, %s90, %s91
    %p95 = pneg %p89
    %p96 = scmp.eq.s32.totalorder %s10, 1
    %p97 = por %p95, %p96
    %p98 = scmp.ne.s32.totalorder %s90, %s93
    %p99 = scmp.eq.s32.totalorder %s10, 0
    %p100 = por %p98, %p99
    %p101 = scmp.ne.s32.totalorder %s90, %s93
    %p102 = scmp.eq.s32.totalorder %s15, 1
    %p103 = por %p101, %p102
    %p104 = scmp.ne.s32.totalorder %s93, %s94
    %p105 = scmp.eq.s32.totalorder %s15, 0
    %p106 = por %p104, %p105
    %p107 = scmp.ne.s32.totalorder %s93, %s94
    %p108 = scmp.eq.s32.totalorder %s16, 1
    %p109 = por %p107, %p108
    %p111 = scmp.ne.s32.totalorder %s94, %s110
    %p112 = scmp.eq.s32.totalorder %s16, 0
    %p113 = por %p111, %p112
    %s114 = ssub.s32 %s17, %s29
    %p115 = scmp.eq.s32.totalorder %s114, 0
    %s117 = sadd.s32 %s116, 1
    %s118 = scalar_select %p115, %s116, %s117
    %p121 = pneg %p115
    %p122 = scmp.eq.s32.totalorder %s10, 1
    %p123 = por %p121, %p122
    %p124 = scmp.ne.s32.totalorder %s116, %s119
    %p125 = scmp.eq.s32.totalorder %s10, 0
    %p126 = por %p124, %p125
    %p127 = scmp.ne.s32.totalorder %s116, %s119
    %p128 = scmp.eq.s32.totalorder %s15, 1
    %p129 = por %p127, %p128
    %p130 = scmp.ne.s32.totalorder %s119, %s120
    %p131 = scmp.eq.s32.totalorder %s15, 0
    %p132 = por %p130, %p131
    %p133 = scmp.ne.s32.totalorder %s119, %s120
    %p134 = scmp.eq.s32.totalorder %s16, 1
    %p135 = por %p133, %p134
    %p137 = scmp.ne.s32.totalorder %s120, %s136
    %p138 = scmp.eq.s32.totalorder %s16, 0
    %p139 = por %p137, %p138
    %p140 = scmp.le.s32.totalorder 1, %s10
    %p141 = scmp.lt.s32.totalorder %s10, 3
    %p142 = pnand %p140, %p141
    %p143 = pneg %p142
    // Predicated region
    $region9: #{_jitted_forward.1} parent=5 // pred_check
      _
    $region10: #{_jitted_forward.1} parent=5 // pred_check_branch
      %145 = sbr.rel (%p142) target = $region12
    $region11: #{_jitted_forward.1} parent=5 // pred_region
      %s146 = ssub.s32 %s10, 1
    $region12: #{_jitted_forward.1} parent=5 // pred_fallthru
      _
    %p147 = scmp.lt.s32.totalorder %s10, 2
    // Predicated region
    $region13: #{_jitted_forward.1} parent=5 // pred_check
      %p148 = pneg %p147
    $region14: #{_jitted_forward.1} parent=5 // pred_check_branch
      %150 = sbr.rel (%p148) target = $region16
    $region15: #{_jitted_forward.1} parent=5 // pred_region
      // Predicated region
      $region17: #{_jitted_forward.1} parent=15 // pred_check
        %p151 = pneg %p44
      $region18: #{_jitted_forward.1} parent=15 // pred_check_branch
        %153 = sbr.rel (%p151) target = $region20
      $region19: #{_jitted_forward.1} parent=15 // pred_region
        %s154 = smul.u32 2, %s18
        %p155 = scmp.lt.s32.totalorder %s17, 1
        %s156 = scalar_select %p155, %s17, 1
        %p157 = scmp.lt.s32.totalorder %s154, 1
        %s158 = scalar_select %p157, %s154, 1
        %s159 = smul.addr %s156, 2
        %s160 = sadd.s32 %s158, %s159
        %s161 = smul.addr %s160, 4
        %s162 = scalar_lea.vmem %s0, %s161
        %s163 = smul.u32 2, %s18
      $region20: #{_jitted_forward.1} parent=15 // pred_fallthru
        _
      // Predicated region
      $region21: #{_jitted_forward.1} parent=15 // pred_check
        %p164 = pneg %p72
      $region22: #{_jitted_forward.1} parent=15 // pred_check_branch
        %166 = sbr.rel (%p164) target = $region24
      $region23: #{_jitted_forward.1} parent=15 // pred_region
        %s167 = smul.u32 2, %s18
        %p168 = scmp.lt.s32.totalorder %s17, 1
        %s169 = scalar_select %p168, %s17, 1
        %p170 = scmp.lt.s32.totalorder %s167, 1
        %s171 = scalar_select %p170, %s167, 1
        %s172 = smul.addr %s169, 2
        %s173 = sadd.s32 %s171, %s172
        %s174 = scalar_lea.vmem %s1, %s173
        %s175 = smul.u32 2, %s18
      $region24: #{_jitted_forward.1} parent=15 // pred_fallthru
        _
    $region16: #{_jitted_forward.1} parent=5 // pred_fallthru
      _
    %p176 = scmp.le.s32.totalorder 1, %s10
    %p177 = scmp.lt.s32.totalorder %s10, 3
    %p178 = pnand %p176, %p177
    %p179 = pneg %p178
    // Predicated region
    $region25: #{_jitted_forward.1} parent=5 // pred_check
      _
    $region26: #{_jitted_forward.1} parent=5 // pred_check_branch
      %181 = sbr.rel (%p178) target = $region28
    $region27: #{_jitted_forward.1} parent=5 // pred_region
      %s182 = ssub.s32 %s10, 1
      %s183 = smul.u32 2, %s20
      %p184 = scmp.lt.s32.totalorder %s19, 1
      %s185 = scalar_select %p184, %s19, 1
      %p186 = scmp.lt.s32.totalorder %s183, 1
      %s187 = scalar_select %p186, %s183, 1
      %s188 = smul.addr %s185, 2
      %s189 = sadd.s32 %s187, %s188
      %s190 = smul.addr %s189, 4
      %s191 = scalar_lea.vmem %s0, %s190
      %p192 = pneg %p50
      %p193 = pneg %p47
      %s194 = smul.u32 2, %s20
      %p195 = scmp.lt.s32.totalorder %s19, 1
      %s196 = scalar_select %p195, %s19, 1
      %p197 = scmp.lt.s32.totalorder %s194, 1
      %s198 = scalar_select %p197, %s194, 1
      %s199 = smul.addr %s196, 2
      %s200 = sadd.s32 %s198, %s199
      %s201 = scalar_lea.vmem %s1, %s200
      %p202 = pneg %p78
      %p203 = pneg %p75
      %p204 = pneg %p106
      %p205 = pneg %p103
      %s206 = smul.u32 2, %s20
      %p207 = scmp.lt.s32.totalorder %s19, 1
      %s208 = scalar_select %p207, %s19, 1
      %p209 = scmp.lt.s32.totalorder %s206, 1
      %s210 = scalar_select %p209, %s206, 1
      %s211 = smul.addr %s208, 2
      %s212 = sadd.s32 %s210, %s211
      %s213 = scalar_lea.vmem %s2, %s212
      %p214 = pneg %p132
      %p215 = pneg %p129
      %p216 = scmp.lt.s32.totalorder %s19, 1
      %s217 = scalar_select %p216, %s19, 1
      %s218 = scalar_lea.vmem %s3, %s217
      %s219 = smul.u32 2, %s20
      %p220 = scmp.lt.s32.totalorder %s19, 1
      %s221 = scalar_select %p220, %s19, 1
      %p222 = scmp.lt.s32.totalorder %s219, 1
      %s223 = scalar_select %p222, %s219, 1
      %s224 = smul.addr %s221, 2
      %s225 = sadd.s32 %s223, %s224
      %s226 = smul.addr %s225, 4
      %s227 = scalar_lea.vmem %s0, %s226
      %s228 = smul.u32 2, %s20
      %s229 = smul.u32 2, %s20
      %p230 = scmp.lt.s32.totalorder %s19, 1
      %s231 = scalar_select %p230, %s19, 1
      %p232 = scmp.lt.s32.totalorder %s229, 1
      %s233 = scalar_select %p232, %s229, 1
      %s234 = smul.addr %s231, 2
      %s235 = sadd.s32 %s233, %s234
      %s236 = scalar_lea.vmem %s1, %s235
      %s237 = smul.u32 2, %s20
      %s238 = smul.u32 2, %s20
      %p239 = scmp.lt.s32.totalorder %s19, 1
      %s240 = scalar_select %p239, %s19, 1
      %p241 = scmp.lt.s32.totalorder %s238, 1
      %s242 = scalar_select %p241, %s238, 1
      %s243 = smul.addr %s240, 2
      %s244 = sadd.s32 %s242, %s243
      %s245 = scalar_lea.vmem %s2, %s244
      %s246 = smul.u32 2, %s20
      %p247 = scmp.lt.s32.totalorder %s19, 1
      %s248 = scalar_select %p247, %s19, 1
      %s249 = scalar_lea.vmem %s3, %s248
      %v250 = vld [vmem:[%s227] sm:$0xff]
      %v251 = vld [vmem:[%s236] sm:$0x3]
      %253 = vst [vmem:[#allocation1] ss:$2 sm:$0xff] %v250
      %v254 = vld.sshfl [vmem:[#allocation1] sm:$0xff pattern:$0x75316420]
      %v255 = vld.sshfl [vmem:[#allocation1 + $0x8] sm:$0xff pattern:$0x75316420]
      %vm258 = vcmask 1043456
      %v259 = vsel %vm258, %v254, -inf
      %v260 = vrot.slane %v259, 4
      %v261 = vmax.f32 %v259, %v260
      %v262 = vrot.slane %v261, 2
      %v263 = vmax.f32 %v261, %v262
      %v264 = vrot.slane %v263, 1
      %v265 = vmax.f32 %v263, %v264
      %v266 = vsel %vm258, %v255, -inf
      %v267 = vrot.slane %v266, 4
      %v268 = vmax.f32 %v266, %v267
      %v269 = vrot.slane %v268, 2
      %v270 = vmax.f32 %v268, %v269
      %v271 = vrot.slane %v270, 1
      %v272 = vmax.f32 %v270, %v271
      %v275 = vrot.slane %v272, 4
      %v276 = vsel %vm258, %v265, %v275
      %v278 = vsub.f32 %v250, %v276
      %v279 = vmul.f32 %v278, 1.442695
      %v280 = vpow.pop %v279
      %282 = vst [vmem:[#allocation1] ss:$2 sm:$0xff] %v280
      %v283 = vld.sshfl [vmem:[#allocation1] sm:$0xff pattern:$0x75316420]
      %v284 = vld.sshfl [vmem:[#allocation1 + $0x8] sm:$0xff pattern:$0x75316420]
      %v287 = vsel %vm258, %v283, 0.0
      %v288 = vrot.slane %v287, 4
      %v289 = vadd.f32 %v287, %v288
      %v290 = vrot.slane %v289, 2
      %v291 = vadd.f32 %v289, %v290
      %v292 = vrot.slane %v291, 1
      %v293 = vadd.f32 %v291, %v292
      %v294 = vsel %vm258, %v284, 0.0
      %v295 = vrot.slane %v294, 4
      %v296 = vadd.f32 %v294, %v295
      %v297 = vrot.slane %v296, 2
      %v298 = vadd.f32 %v296, %v297
      %v299 = vrot.slane %v298, 1
      %v300 = vadd.f32 %v298, %v299
      %v301 = vlog2.pop %v293
      %v302 = vmul.f32 %v301, 0.6931472
      %v303 = vlog2.pop %v300
      %v304 = vmul.f32 %v303, 0.6931472
      %v305 = vadd.f32 %v265, %v302
      %v306 = vadd.f32 %v272, %v304
      %v307 = vlaneseq
      %v308 = vshrl.u32 %v307, 7
      %v309 = vperm.slane %v251, 0
      %v310 = vperm.slane %v251, 1
      %vm311 = vcmp.eq.s32.totalorder %v308, %v309
      %vm312 = vcmp.eq.s32.totalorder %v308, %v310
      %313 = vst [vmem:[#allocation1] ss:$2 sm:$0xff] %v250
      %v314 = vld.sshfl [vmem:[#allocation1] sm:$0xff pattern:$0x75316420]
      %v315 = vld.sshfl [vmem:[#allocation1 + $0x8] sm:$0xff pattern:$0x75316420]
      %v318 = vsel %vm311, %v314, 0.0
      %v319 = vsel %vm312, %v315, 0.0
      %v320 = vsel %vm258, %v318, 0.0
      %v321 = vrot.slane %v320, 4
      %v322 = vadd.f32 %v320, %v321
      %v323 = vrot.slane %v322, 2
      %v324 = vadd.f32 %v322, %v323
      %v325 = vrot.slane %v324, 1
      %v326 = vadd.f32 %v324, %v325
      %v327 = vsel %vm258, %v319, 0.0
      %v328 = vrot.slane %v327, 4
      %v329 = vadd.f32 %v327, %v328
      %v330 = vrot.slane %v329, 2
      %v331 = vadd.f32 %v329, %v330
      %v332 = vrot.slane %v331, 1
      %v333 = vadd.f32 %v331, %v332
      %v334 = vsub.f32 %v305, %v326
      %v335 = vsub.f32 %v306, %v333
      %v338 = vrot.slane %v335, 7
      %vm339 = vcmask 1040384
      %v340 = vsel %vm339, %v334, %v338
      %v342 = vlaneseq
      %vm343 = vcmp.ge.s32.totalorder %v342, 0
      %vm344 = vcmp.lt.s32.totalorder %v342, 256
      %vm345 = vmand %vm343, %vm344
      %346 = vst.msk [vmem:[%s245] sm:$0x3] %vm345, %v340
      %p347 = scmp.eq.s32.totalorder %s20, 0
      // Predicated region
      $region29: #{_jitted_forward.1} parent=27 // pred_check
        %p348 = pneg %p347
      $region30: #{_jitted_forward.1} parent=27 // pred_check_branch
        %350 = sbr.rel (%p348) target = $region32
      $region31: #{_jitted_forward.1} parent=27 // pred_region
        %351 = vst.msk [vmem:[#allocation2] sm:$0x3] %vm345, 0.0
      $region32: #{_jitted_forward.1} parent=27 // pred_fallthru
        _
      %v352 = vld [vmem:[#allocation2] sm:$0x3]
      %v353 = vadd.f32 %v352, %v340
      %354 = vst.msk [vmem:[#allocation2] sm:$0x3] %vm345, %v353
      // Predicated region
      $region33: #{_jitted_forward.1} parent=27 // pred_check
        %p355 = pneg %p347
      $region34: #{_jitted_forward.1} parent=27 // pred_check_branch
        %357 = sbr.rel (%p355) target = $region36
      $region35: #{_jitted_forward.1} parent=27 // pred_region
        %v358 = vld [vmem:[#allocation2] sm:$0x3]
        %v360 = vperm.slane %v358, 0
        %v361 = vperm.slane %v358, 1
        %v364 = vsel %vm339, %v360, 0.0
        %v365 = vsel %vm339, %v361, 0.0
        %v366 = vadd.f32 %v364, %v365
        %367 = vadd.xlane.f32.xlu0 %v366
        %v368 = vpop.xlane.xlu0 %367
        %v369 = vrot.slane %v368, 4
        %v370 = vadd.f32 %v368, %v369
        %v371 = vrot.slane %v370, 2
        %v372 = vadd.f32 %v370, %v371
        %v373 = vrot.slane %v372, 1
        %v374 = vadd.f32 %v372, %v373
        %s375 = vtos %v374
        %v376 = vstv %s375
        %377 = vst [vmem:[%s249] sm:$0x1] %v376
      $region36: #{_jitted_forward.1} parent=27 // pred_fallthru
        _
      %s378 = smul.u32 2, %s20
      %p379 = scmp.lt.s32.totalorder %s19, 1
      %s380 = scalar_select %p379, %s19, 1
      %p381 = scmp.lt.s32.totalorder %s378, 1
      %s382 = scalar_select %p381, %s378, 1
      %s383 = smul.addr %s380, 2
      %s384 = sadd.s32 %s382, %s383
      %s385 = scalar_lea.vmem %s2, %s384
      %p386 = scmp.lt.s32.totalorder %s19, 1
      %s387 = scalar_select %p386, %s19, 1
      %s388 = scalar_lea.vmem %s3, %s387
      // Predicated region
      $region37: #{_jitted_forward.1} parent=27 // pred_check
        %p389 = pneg %p103
      $region38: #{_jitted_forward.1} parent=27 // pred_check_branch
        %391 = sbr.rel (%p389) target = $region40
      $region39: #{_jitted_forward.1} parent=27 // pred_region
        %s392 = smul.u32 2, %s20
      $region40: #{_jitted_forward.1} parent=27 // pred_fallthru
        _
      // Predicated region
      $region41: #{_jitted_forward.1} parent=27 // pred_check
        %p393 = pneg %p129
      $region42: #{_jitted_forward.1} parent=27 // pred_check_branch
        %395 = sbr.rel (%p393) target = $region44
      $region43: #{_jitted_forward.1} parent=27 // pred_region
        _
      $region44: #{_jitted_forward.1} parent=27 // pred_fallthru
        _
    $region28: #{_jitted_forward.1} parent=5 // pred_fallthru
      _
    %p396 = scmp.le.s32.totalorder 2, %s10
    // Predicated region
    $region45: #{_jitted_forward.1} parent=5 // pred_check
      %p397 = pneg %p396
    $region46: #{_jitted_forward.1} parent=5 // pred_check_branch
      %399 = sbr.rel (%p397) target = $region48
    $region47: #{_jitted_forward.1} parent=5 // pred_region
      %s400 = ssub.s32 %s10, 2
      // Predicated region
      $region49: #{_jitted_forward.1} parent=47 // pred_check
        %p401 = pneg %p109
      $region50: #{_jitted_forward.1} parent=47 // pred_check_branch
        %403 = sbr.rel (%p401) target = $region52
      $region51: #{_jitted_forward.1} parent=47 // pred_region
        %s404 = smul.u32 2, %s22
        %p405 = scmp.lt.s32.totalorder %s21, 1
        %s406 = scalar_select %p405, %s21, 1
        %p407 = scmp.lt.s32.totalorder %s404, 1
        %s408 = scalar_select %p407, %s404, 1
        %s409 = smul.addr %s406, 2
        %s410 = sadd.s32 %s408, %s409
        %s411 = scalar_lea.vmem %s2, %s410
      $region52: #{_jitted_forward.1} parent=47 // pred_fallthru
        _
      // Predicated region
      $region53: #{_jitted_forward.1} parent=47 // pred_check
        %p412 = pneg %p135
      $region54: #{_jitted_forward.1} parent=47 // pred_check_branch
        %414 = sbr.rel (%p412) target = $region56
      $region55: #{_jitted_forward.1} parent=47 // pred_region
        %p415 = scmp.lt.s32.totalorder %s21, 1
        %s416 = scalar_select %p415, %s21, 1
        %s417 = scalar_lea.vmem %s3, %s416
      $region56: #{_jitted_forward.1} parent=47 // pred_fallthru
        _
    $region48: #{_jitted_forward.1} parent=5 // pred_fallthru
      _
  $region6: #{_jitted_forward.1} parent=0 // loop_footer
    %s14 = sadd.s32 1, %s10
  $region7: #{_jitted_forward.1} parent=0 // loop_footer_branch
    %9 = sbr.rel target = $region3
  $region8: #{_jitted_forward.1} parent=0 // loop_exit
    _

</llo_original>
